<compile_context>
chip_gen: v7x
topology: tpu7x:2x2x1
jax: 0.10.0
libtpu: 0.0.40
codegen_flags: <defaults>
</compile_context>

<pallas_src>
import functools

import jax
import jax.numpy as jnp
from jax import lax
from jax.experimental import pallas as pl
from jax.experimental.pallas import tpu as pltpu

NS_ITERS = 20                      # Newton-Schulz iterations for matrix square root
_NS_DTYPE = jnp.bfloat16           # NS iterate dtype (matmuls accumulate in f32)


def _vmem_limit_bytes() -> int:
    """Scoped-VMEM cap derived from the chip (leave headroom below physical)."""
    try:
        cap = pltpu.get_tpu_info().vmem_capacity_bytes
        return min(int(cap * 3 // 4), 110 << 20)
    except Exception:
        return 48 << 20            # safe on every generation (incl. v7x's 64 MiB)


def _pick_batch_tile(n: int) -> int:
    """Largest batch tile (<=512, multiple of 8) that divides N: keeps the MXU
    contraction dimension deep while avoiding garbage from padded edge blocks."""
    for t in (512, 256, 128, 64, 32, 16, 8):
        if n % t == 0:
            return t
    return n


def _stats_kernel(emb_ref, sum_ref, gram_ref, ssq_ref):
    """Grid = (2 sets [parallel], N/TN batch tiles [arbitrary]).

    emb_ref : (1, TN, D) tile of one set, native dtype.
    Outputs (accumulated across the batch-tile axis, one block per set):
      sum_ref  (1, 1, D)  f32   -- sum_i x_i
      gram_ref (1, D, D)  f32   -- sum_i x_i x_i^T   (uncentered Gram)
      ssq_ref  (1, 1, 1)  f32   -- sum_ij x_ij^2     (for the covariance traces)
    """
    i = pl.program_id(1)

    @pl.when(i == 0)
    def _init():
        sum_ref[...] = jnp.zeros_like(sum_ref)
        gram_ref[...] = jnp.zeros_like(gram_ref)
        ssq_ref[...] = jnp.zeros_like(ssq_ref)

    x = emb_ref[0]                                   # (TN, D), native dtype
    xf = x.astype(jnp.float32)

    sum_ref[0] += jnp.sum(xf, axis=0, keepdims=True)     # (1, D)
    ssq_ref[...] += jnp.sum(xf * xf)                     # scalar trace accumulator

    # Uncentered Gram: contract over the batch axis directly (no X^T materialized).
    gram_ref[0] += lax.dot_general(
        x, x,
        dimension_numbers=(((0,), (0,)), ((), ())),
        preferred_element_type=jnp.float32)


def _fid_kernel(n, sums_ref, grams_ref, ssq_ref, out_ref):
    """Single invocation: statistics -> covariances -> Fréchet distance.

    sums_ref  : (2, 1, D) f32 VMEM
    grams_ref : (2, D, D) f32 VMEM
    ssq_ref   : (2,)      f32 SMEM
    out_ref   : (1,)      f32 SMEM
    """
    d = grams_ref.shape[-1]
    inv_n = 1.0 / n
    inv_nm1 = 1.0 / max(n - 1, 1)                    # guard N == 1

    mu_x = sums_ref[0] * inv_n                       # (1, D)
    mu_y = sums_ref[1] * inv_n

    # ||mu_x - mu_y||^2
    dmu = mu_x - mu_y
    mean_term = jnp.sum(dmu * dmu)

    # Rank-1 outer products mu^T mu via a K=1 contraction (no transpose copy).
    outer_dims = (((0,), (0,)), ((), ()))
    outer_x = lax.dot_general(mu_x, mu_x, outer_dims, preferred_element_type=jnp.float32)
    outer_y = lax.dot_general(mu_y, mu_y, outer_dims, preferred_element_type=jnp.float32)

    # Cov = (Gram - N * mu mu^T) / (N - 1)
    cov_x = (grams_ref[0] - n * outer_x) * inv_nm1
    cov_y = (grams_ref[1] - n * outer_y) * inv_nm1

    # Traces from the streamed sum-of-squares (no eye mask, no cov*eye pass).
    tr_cov_x = (ssq_ref[0] - n * jnp.sum(mu_x * mu_x)) * inv_nm1
    tr_cov_y = (ssq_ref[1] - n * jnp.sum(mu_y * mu_y)) * inv_nm1

    # --- tr(sqrtm(cov_x @ cov_y)) via Newton-Schulz ---
    a = jnp.dot(cov_x, cov_y, preferred_element_type=jnp.float32)    # (D, D) f32
    fro = jnp.sqrt(jnp.sum(a * a)) + 1e-12

    def eye_mask():
        # Recomputed where needed (pure VPU, hidden under the MXU matmuls) so no
        # full-precision (D, D) identity stays live across the NS loop.
        r = lax.broadcasted_iota(jnp.int32, (d, d), 0)
        c = lax.broadcasted_iota(jnp.int32, (d, d), 1)
        return r == c

    y0 = (a * (1.0 / fro)).astype(_NS_DTYPE)
    z0 = jnp.where(eye_mask(), 1.0, 0.0).astype(_NS_DTYPE)

    def ns_body(_, carry):
        y_i, z_i = carry
        zy = jnp.dot(z_i, y_i, preferred_element_type=jnp.float32)
        # T = 0.5 * (3*I - Z@Y), diagonal rebuilt from iota each step.
        t = (jnp.where(eye_mask(), 1.5, 0.0) - 0.5 * zy).astype(_NS_DTYPE)
        y_n = jnp.dot(y_i, t, preferred_element_type=jnp.float32).astype(_NS_DTYPE)
        z_n = jnp.dot(t, z_i, preferred_element_type=jnp.float32).astype(_NS_DTYPE)
        return y_n, z_n

    # Unroll only for toy D; at production D the 3 big matmuls per step dwarf the
    # ~600-cycle loop overhead and full unrolling just bloats IMEM / live ranges.
    y_f, _ = lax.fori_loop(0, NS_ITERS, ns_body, (y0, z0), unroll=(d <= 256))

    tr_sqrt = jnp.sum(jnp.where(eye_mask(), y_f.astype(jnp.float32), 0.0)) * jnp.sqrt(fro)

    out_ref[0] = mean_term + tr_cov_x + tr_cov_y - 2.0 * tr_sqrt


def frechet_inception_distance(real_emb: jax.Array, fake_emb: jax.Array,
                               *, tile_n: int | None = None) -> jax.Array:
    """real_emb, fake_emb: (N, D) embeddings (f32 or bf16). Returns scalar FID (f32)."""
    assert real_emb.shape == fake_emb.shape and real_emb.ndim == 2, \
        "embeddings must be two (N, D) arrays of identical shape"
    n, d = real_emb.shape
    if tile_n is None:
        tile_n = _pick_batch_tile(n)
    assert n % tile_n == 0 and (tile_n % 8 == 0 or tile_n == n), \
        "tile_n must divide N and be a multiple of 8 (or equal N)"

    vmem_limit = _vmem_limit_bytes()

    # Stack real/fake into a leading axis so megacore chips run the two Gram
    # accumulations on separate TensorCores.  Embeddings stay in their native
    # dtype (bf16 inputs halve the streamed HBM bytes and feed the MXU directly).
    emb = jnp.stack([real_emb, fake_emb], axis=0)            # (2, N, D)

    sums, grams, ssq = pl.pallas_call(
        _stats_kernel,
        out_shape=(
            jax.ShapeDtypeStruct((2, 1, d), jnp.float32),    # per-set feature sums
            jax.ShapeDtypeStruct((2, d, d), jnp.float32),    # per-set uncentered Grams
            jax.ShapeDtypeStruct((2, 1, 1), jnp.float32),    # per-set sum of squares
        ),
        grid=(2, n // tile_n),
        in_specs=[pl.BlockSpec((1, tile_n, d), lambda s, i: (s, i, 0))],
        out_specs=(
            pl.BlockSpec((1, 1, d), lambda s, i: (s, 0, 0)),
            pl.BlockSpec((1, d, d), lambda s, i: (s, 0, 0)),
            pl.BlockSpec((1, 1, 1), lambda s, i: (s, 0, 0)),
        ),
        compiler_params=pltpu.CompilerParams(
            dimension_semantics=("parallel", "arbitrary"),
            vmem_limit_bytes=vmem_limit,
        ),
    )(emb)

    out = pl.pallas_call(
        functools.partial(_fid_kernel, n),
        out_shape=jax.ShapeDtypeStruct((1,), jnp.float32),
        in_specs=[
            pl.BlockSpec(memory_space=pltpu.MemorySpace.VMEM),    # sums  (2, 1, D)
            pl.BlockSpec(memory_space=pltpu.MemorySpace.VMEM),    # grams (2, D, D)
            pl.BlockSpec(memory_space=pltpu.MemorySpace.SMEM),    # ssq   (2,)
        ],
        out_specs=pl.BlockSpec(memory_space=pltpu.MemorySpace.SMEM),
        compiler_params=pltpu.CompilerParams(vmem_limit_bytes=vmem_limit),
    )(sums, grams, ssq.reshape(2))
    return out[0]


if __name__ == "__main__":
    # Small, deterministic synthetic "embeddings" (stand-in for InceptionV3 features).
    N, D = 256, 256          # batch samples x embedding features (lane-aligned)
    key = jax.random.PRNGKey(0)
    k_real, k_fake = jax.random.split(key)
    real_embeddings = jax.random.normal(k_real, (N, D), dtype=jnp.float32)
    fake_embeddings = 0.8 * jax.random.normal(k_fake, (N, D), dtype=jnp.float32) + 0.1

    # tile_n=64 exercises the streamed multi-tile accumulation path (grid = (2, 4)).
    fid_value = frechet_inception_distance(real_embeddings, fake_embeddings, tile_n=64)
    jax.block_until_ready(fid_value)
    print("KERNEL_OK")
</pallas_src>

<mosaic_0001>
module attributes {stable_mosaic.version = 11 : i64} {
  func.func @_stats_kernel(%arg0: i32, %arg1: i32, %arg2: memref<1x64x256xf32, #tpu.memory_space<vmem>>, %arg3: memref<1x1x256xf32, #tpu.memory_space<vmem>>, %arg4: memref<1x256x256xf32, #tpu.memory_space<vmem>>, %arg5: memref<1x1x1xf32, #tpu.memory_space<vmem>>) attributes {dimension_semantics = [#tpu.dimension_semantics<parallel>, #tpu.dimension_semantics<arbitrary>], iteration_bounds = array<i64: 2, 4>, scalar_prefetch = 0 : i64, scratch_operands = 0 : i64, tpu.core_type = #tpu.core_type<tc>, window_params = [{transform_indices = @transform_0, window_bounds = array<i64: 1, 64, 256>}, {transform_indices = @transform_1, window_bounds = array<i64: 1, 1, 256>}, {transform_indices = @transform_2, window_bounds = array<i64: 1, 256, 256>}, {transform_indices = @transform_3, window_bounds = array<i64: 1, 1, 1>}]} {
    %c0_i32 = arith.constant 0 : i32
    %0 = arith.cmpi eq, %arg1, %c0_i32 : i32
    %1 = arith.extui %0 : i1 to i32
    %c0_i32_0 = arith.constant 0 : i32
    %2 = arith.cmpi ne, %1, %c0_i32_0 : i32
    scf.if %2 {
      %cst_23 = arith.constant 0.000000e+00 : f32
      %29 = vector.broadcast %cst_23 : f32 to vector<1x1x256xf32>
      %c0_24 = arith.constant 0 : index
      %c0_25 = arith.constant 0 : index
      %c0_26 = arith.constant 0 : index
      %30 = vector.load %arg3[%c0_24, %c0_25, %c0_26] : memref<1x1x256xf32, #tpu.memory_space<vmem>>, vector<1x1x256xf32>
      tpu.vector_store %arg3[%c0_24, %c0_25, %c0_26], %29 {strides = array<i32>} : memref<1x1x256xf32, #tpu.memory_space<vmem>>, vector<1x1x256xf32>,
      %cst_27 = arith.constant 0.000000e+00 : f32
      %31 = vector.broadcast %cst_27 : f32 to vector<1x256x256xf32>
      %c0_28 = arith.constant 0 : index
      %c0_29 = arith.constant 0 : index
      %c0_30 = arith.constant 0 : index
      %32 = vector.load %arg4[%c0_28, %c0_29, %c0_30] : memref<1x256x256xf32, #tpu.memory_space<vmem>>, vector<1x256x256xf32>
      tpu.vector_store %arg4[%c0_28, %c0_29, %c0_30], %31 {strides = array<i32>} : memref<1x256x256xf32, #tpu.memory_space<vmem>>, vector<1x256x256xf32>,
      %cst_31 = arith.constant 0.000000e+00 : f32
      %33 = vector.broadcast %cst_31 : f32 to vector<1x1x1xf32>
      %c0_32 = arith.constant 0 : index
      %c0_33 = arith.constant 0 : index
      %c0_34 = arith.constant 0 : index
      %34 = vector.load %arg5[%c0_32, %c0_33, %c0_34] : memref<1x1x1xf32, #tpu.memory_space<vmem>>, vector<1x1x1xf32>
      tpu.vector_store %arg5[%c0_32, %c0_33, %c0_34], %33 {strides = array<i32>} : memref<1x1x1xf32, #tpu.memory_space<vmem>>, vector<1x1x1xf32>,
    } else {
    }
    %c0 = arith.constant 0 : index
    %c0_1 = arith.constant 0 : index
    %c0_2 = arith.constant 0 : index
    %3 = vector.load %arg2[%c0, %c0_1, %c0_2] : memref<1x64x256xf32, #tpu.memory_space<vmem>>, vector<1x64x256xf32>
    %4 = vector.shape_cast %3 : vector<1x64x256xf32> to vector<64x256xf32>
    %c0_3 = arith.constant 0 : index
    %c0_4 = arith.constant 0 : index
    %c0_5 = arith.constant 0 : index
    %5 = vector.load %arg3[%c0_3, %c0_4, %c0_5] : memref<1x1x256xf32, #tpu.memory_space<vmem>>, vector<1x1x256xf32>
    %6 = vector.shape_cast %5 : vector<1x1x256xf32> to vector<1x256xf32>
    %cst = arith.constant dense<0.000000e+00> : vector<256xf32>
    %7 = vector.multi_reduction <add>, %4, %cst [0] : vector<64x256xf32> to vector<256xf32>
    %8 = vector.shape_cast %7 : vector<256xf32> to vector<1x256xf32>
    %9 = arith.addf %6, %8 : vector<1x256xf32>
    %c0_6 = arith.constant 0 : index
    %c0_7 = arith.constant 0 : index
    %c0_8 = arith.constant 0 : index
    %10 = vector.load %arg3[%c0_6, %c0_7, %c0_8] : memref<1x1x256xf32, #tpu.memory_space<vmem>>, vector<1x1x256xf32>
    %11 = vector.shape_cast %10 : vector<1x1x256xf32> to vector<1x256xf32>
    %12 = vector.shape_cast %9 : vector<1x256xf32> to vector<1x1x256xf32>
    tpu.vector_store %arg3[%c0_6, %c0_7, %c0_8], %12 {strides = array<i32>} : memref<1x1x256xf32, #tpu.memory_space<vmem>>, vector<1x1x256xf32>,
    %c0_9 = arith.constant 0 : index
    %c0_10 = arith.constant 0 : index
    %c0_11 = arith.constant 0 : index
    %13 = vector.load %arg5[%c0_9, %c0_10, %c0_11] : memref<1x1x1xf32, #tpu.memory_space<vmem>>, vector<1x1x1xf32>
    %14 = arith.mulf %4, %4 : vector<64x256xf32>
    %15 = vector.shape_cast %14 : vector<64x256xf32> to vector<1x64x256xf32>
    %cst_12 = arith.constant dense<0.000000e+00> : vector<1xf32>
    %16 = vector.multi_reduction <add>, %15, %cst_12 [1, 2] : vector<1x64x256xf32> to vector<1xf32>
    %17 = vector.shape_cast %16 : vector<1xf32> to vector<1x1x1xf32>
    %18 = vector.extract %17[0, 0, 0] : f32 from vector<1x1x1xf32>
    %19 = vector.broadcast %18 : f32 to vector<1x1x1xf32>
    %20 = arith.addf %13, %19 : vector<1x1x1xf32>
    %c0_13 = arith.constant 0 : index
    %c0_14 = arith.constant 0 : index
    %c0_15 = arith.constant 0 : index
    %21 = vector.load %arg5[%c0_13, %c0_14, %c0_15] : memref<1x1x1xf32, #tpu.memory_space<vmem>>, vector<1x1x1xf32>
    tpu.vector_store %arg5[%c0_13, %c0_14, %c0_15], %20 {strides = array<i32>} : memref<1x1x1xf32, #tpu.memory_space<vmem>>, vector<1x1x1xf32>,
    %c0_16 = arith.constant 0 : index
    %c0_17 = arith.constant 0 : index
    %c0_18 = arith.constant 0 : index
    %22 = vector.load %arg4[%c0_16, %c0_17, %c0_18] : memref<1x256x256xf32, #tpu.memory_space<vmem>>, vector<1x256x256xf32>
    %23 = vector.shape_cast %22 : vector<1x256x256xf32> to vector<256x256xf32>
    %cst_19 = arith.constant dense<0.000000e+00> : vector<256x256xf32>
    %24 = tpu.matmul %4, %4, %cst_19 {dimension_numbers = #tpu.dot_dimension_numbers<[0], [0], [1], [1], [0, 1, 1, 1], [], []>} : vector<64x256xf32>, vector<64x256xf32>, vector<256x256xf32> -> vector<256x256xf32>
    %25 = arith.addf %23, %24 : vector<256x256xf32>
    %c0_20 = arith.constant 0 : index
    %c0_21 = arith.constant 0 : index
    %c0_22 = arith.constant 0 : index
    %26 = vector.load %arg4[%c0_20, %c0_21, %c0_22] : memref<1x256x256xf32, #tpu.memory_space<vmem>>, vector<1x256x256xf32>
    %27 = vector.shape_cast %26 : vector<1x256x256xf32> to vector<256x256xf32>
    %28 = vector.shape_cast %25 : vector<256x256xf32> to vector<1x256x256xf32>
    tpu.vector_store %arg4[%c0_20, %c0_21, %c0_22], %28 {strides = array<i32>} : memref<1x256x256xf32, #tpu.memory_space<vmem>>, vector<1x256x256xf32>,
    return
  }
  func.func @transform_0(%arg0: i32, %arg1: i32) -> (i32, i32, i32) {
    %c0_i32 = arith.constant 0 : i32
    %c0_i32_0 = arith.constant 0 : i32
    return %arg0, %arg1, %c0_i32 : i32, i32, i32
  }
  func.func @transform_1(%arg0: i32, %arg1: i32) -> (i32, i32, i32) {
    %c0_i32 = arith.constant 0 : i32
    %c0_i32_0 = arith.constant 0 : i32
    %c0_i32_1 = arith.constant 0 : i32
    return %arg0, %c0_i32, %c0_i32_0 : i32, i32, i32
  }
  func.func @transform_2(%arg0: i32, %arg1: i32) -> (i32, i32, i32) {
    %c0_i32 = arith.constant 0 : i32
    %c0_i32_0 = arith.constant 0 : i32
    %c0_i32_1 = arith.constant 0 : i32
    return %arg0, %c0_i32, %c0_i32_0 : i32, i32, i32
  }
  func.func @transform_3(%arg0: i32, %arg1: i32) -> (i32, i32, i32) {
    %c0_i32 = arith.constant 0 : i32
    %c0_i32_0 = arith.constant 0 : i32
    %c0_i32_1 = arith.constant 0 : i32
    return %arg0, %c0_i32, %c0_i32_0 : i32, i32, i32
  }
}

</mosaic_0001>

<llo_original>
// kernel: tpu_custom_call.1
$region0: #{tpu_custom_call.1}
  #allocation0 [shape = 'u32[]', space=smem, size = 0x4, offset = 0x4, fixed_abs, tag = 'smem constant byte address 0x4 - core index']
  #allocation1 [shape = 'u32[144,128]{1,0:T(1,128)}', space=vmem, size = 0x12000, scoped, tag = 'internal scratch']
  %s0 = inlined_call_operand.hbm [shape: f32[2,256,256], index: 0, kind: input, shape index: {}]
  %s1 = inlined_call_operand.hbm [shape: f32[2,1,256], index: 1, kind: output, shape index: {0}]
  %s2 = inlined_call_operand.hbm [shape: f32[2,256,256], index: 2, kind: output, shape index: {1}]
  %s3 = inlined_call_operand.vmem [shape: f32[2,1,1], index: 3, kind: output, shape index: {2}]
  %4 = xla_tuple %s1, %s2, %s3
  %s5 = sld [smem:[#allocation0]]
  $region61: #{tpu_custom_call.1} parent=0
    _
  %s7 = ssub.s32 1, %s5
  %s8 = scalar_select 0, %s7, %s5
  $region1: #{tpu_custom_call.1} parent=0
    #allocation2 [shape = 'u8[131072]{0}', space=vmem, size = 0x20000, scoped, tag = 'input window, operand 0']
    #allocation3 [shape = 's32[2]{0}', space=sflag, size = 0x8, scoped, tag = 'scoped memory for tpu_custom_call.1']
    #allocation4 [shape = 's32[2]{0}', space=sflag, size = 0x8, scoped, tag = 'scoped memory for tpu_custom_call.1']
    #allocation5 [shape = 'u8[2048]{0}', space=vmem, size = 0x800, scoped, tag = 'output window, operand 0']
    #allocation6 [shape = 'u8[524288]{0}', space=vmem, size = 0x80000, scoped, tag = 'output window, operand 1']
    #allocation7 [shape = 's32[2]{0}', space=sflag, size = 0x8, scoped, tag = 'scoped memory for tpu_custom_call.1']
    %9 = vsyncpa [#allocation3], 0
    %s10 = scalar_lea.sflag [#allocation3], 1
    %11 = vsyncpa %s10, 0
    %12 = vsyncpa [#allocation4], 0
    %s13 = scalar_lea.sflag [#allocation4], 1
    %14 = vsyncpa %s13, 0
    %15 = vsyncpa [#allocation7], 0
    %s16 = scalar_lea.sflag [#allocation7], 1
    %17 = vsyncpa %s16, 0
    loop: start=0, step=1, limit=10
    $region2: #{tpu_custom_call.1} parent=1 // loop_pre_header
      _
    $region3: #{tpu_custom_call.1} parent=1 // loop_header
      %s19 = sphi 0, %s23
      %p20 = scmp.ge.s32.totalorder %s19, 10
      %s26 = sphi 0, %s38
      %s27 = sphi 0, %s34
      %s28 = sphi 0, %s26
      %s29 = sphi 0, %s27
      %s30 = sphi 0, %s28
      %s31 = sphi 0, %s29
      %s43 = sphi 0, %s45
      %s46 = sphi 0, %s43
      %s47 = sphi 0, %s46
      %s63 = sphi 0, %s47
      %s69 = sphi 0, %s71
      %s72 = sphi 0, %s69
      %s73 = sphi 0, %s72
      %s89 = sphi 0, %s73
      %s95 = sphi 0, %s97
      %s98 = sphi 0, %s95
      %s99 = sphi 0, %s98
      %s115 = sphi 0, %s99
      %s121 = sphi 0, %s123
      %s124 = sphi 0, %s121
      %s125 = sphi 0, %s124
      %s141 = sphi 0, %s125
    $region4: #{tpu_custom_call.1} parent=1 // loop_header_branch
      %22 = sbr.rel (%p20) target = $region8
    $region5: #{tpu_custom_call.1} parent=1 // loop_body
      %s24 = ssub.s32 %s19, 1
      %s25 = ssub.s32 %s19, 2
      %s32 = sadd.s32 1, %s27
      %p33 = scmp.ge.s32.totalorder %s32, 4
      %s34 = scalar_select %p33, 0, %s32
      %s35 = sadd.s32 1, %s26
      %s36 = scalar_select %p33, %s35, %s26
      %p37 = scmp.ge.s32.totalorder %s36, 2
      %s38 = scalar_select %p37, 0, %s36
      %s39 = ssub.s32 %s26, %s38
      %s40 = ssub.s32 %s27, %s34
      %s41 = sor.u32 %s39, %s40
      %p42 = scmp.eq.s32.totalorder %s41, 0
      %s44 = sadd.s32 %s43, 1
      %s45 = scalar_select %p42, %s43, %s44
      %p48 = pneg %p42
      %p49 = scmp.eq.s32.totalorder %s19, 7
      %p50 = por %p48, %p49
      %p51 = scmp.ne.s32.totalorder %s43, %s46
      %p52 = scmp.eq.s32.totalorder %s19, 0
      %p53 = por %p51, %p52
      %p54 = scmp.ne.s32.totalorder %s43, %s46
      %p55 = scmp.eq.s32.totalorder %s24, 7
      %p56 = por %p54, %p55
      %p57 = scmp.ne.s32.totalorder %s46, %s47
      %p58 = scmp.eq.s32.totalorder %s24, 0
      %p59 = por %p57, %p58
      %p60 = scmp.ne.s32.totalorder %s46, %s47
      %p61 = scmp.eq.s32.totalorder %s25, 7
      %p62 = por %p60, %p61
      %p64 = scmp.ne.s32.totalorder %s47, %s63
      %p65 = scmp.eq.s32.totalorder %s25, 0
      %p66 = por %p64, %p65
      %s67 = ssub.s32 %s26, %s38
      %p68 = scmp.eq.s32.totalorder %s67, 0
      %s70 = sadd.s32 %s69, 1
      %s71 = scalar_select %p68, %s69, %s70
      %p74 = pneg %p68
      %p75 = scmp.eq.s32.totalorder %s19, 7
      %p76 = por %p74, %p75
      %p77 = scmp.ne.s32.totalorder %s69, %s72
      %p78 = scmp.eq.s32.totalorder %s19, 0
      %p79 = por %p77, %p78
      %p80 = scmp.ne.s32.totalorder %s69, %s72
      %p81 = scmp.eq.s32.totalorder %s24, 7
      %p82 = por %p80, %p81
      %p83 = scmp.ne.s32.totalorder %s72, %s73
      %p84 = scmp.eq.s32.totalorder %s24, 0
      %p85 = por %p83, %p84
      %p86 = scmp.ne.s32.totalorder %s72, %s73
      %p87 = scmp.eq.s32.totalorder %s25, 7
      %p88 = por %p86, %p87
      %p90 = scmp.ne.s32.totalorder %s73, %s89
      %p91 = scmp.eq.s32.totalorder %s25, 0
      %p92 = por %p90, %p91
      %s93 = ssub.s32 %s26, %s38
      %p94 = scmp.eq.s32.totalorder %s93, 0
      %s96 = sadd.s32 %s95, 1
      %s97 = scalar_select %p94, %s95, %s96
      %p100 = pneg %p94
      %p101 = scmp.eq.s32.totalorder %s19, 7
      %p102 = por %p100, %p101
      %p103 = scmp.ne.s32.totalorder %s95, %s98
      %p104 = scmp.eq.s32.totalorder %s19, 0
      %p105 = por %p103, %p104
      %p106 = scmp.ne.s32.totalorder %s95, %s98
      %p107 = scmp.eq.s32.totalorder %s24, 7
      %p108 = por %p106, %p107
      %p109 = scmp.ne.s32.totalorder %s98, %s99
      %p110 = scmp.eq.s32.totalorder %s24, 0
      %p111 = por %p109, %p110
      %p112 = scmp.ne.s32.totalorder %s98, %s99
      %p113 = scmp.eq.s32.totalorder %s25, 7
      %p114 = por %p112, %p113
      %p116 = scmp.ne.s32.totalorder %s99, %s115
      %p117 = scmp.eq.s32.totalorder %s25, 0
      %p118 = por %p116, %p117
      %s119 = ssub.s32 %s26, %s38
      %p120 = scmp.eq.s32.totalorder %s119, 0
      %s122 = sadd.s32 %s121, 1
      %s123 = scalar_select %p120, %s121, %s122
      %p126 = pneg %p120
      %p127 = scmp.eq.s32.totalorder %s19, 7
      %p128 = por %p126, %p127
      %p129 = scmp.ne.s32.totalorder %s121, %s124
      %p130 = scmp.eq.s32.totalorder %s19, 0
      %p131 = por %p129, %p130
      %p132 = scmp.ne.s32.totalorder %s121, %s124
      %p133 = scmp.eq.s32.totalorder %s24, 7
      %p134 = por %p132, %p133
      %p135 = scmp.ne.s32.totalorder %s124, %s125
      %p136 = scmp.eq.s32.totalorder %s24, 0
      %p137 = por %p135, %p136
      %p138 = scmp.ne.s32.totalorder %s124, %s125
      %p139 = scmp.eq.s32.totalorder %s25, 7
      %p140 = por %p138, %p139
      %p142 = scmp.ne.s32.totalorder %s125, %s141
      %p143 = scmp.eq.s32.totalorder %s25, 0
      %p144 = por %p142, %p143
      %p145 = scmp.le.s32.totalorder 1, %s19
      %p146 = scmp.lt.s32.totalorder %s19, 9
      %p147 = pnand %p145, %p146
      %p148 = pneg %p147
      // Predicated region
      $region9: #{tpu_custom_call.1} parent=5 // pred_check
        _
      $region10: #{tpu_custom_call.1} parent=5 // pred_check_branch
        %150 = sbr.rel (%p147) target = $region12
      $region11: #{tpu_custom_call.1} parent=5 // pred_region
        %s151 = ssub.s32 %s19, 1
      $region12: #{tpu_custom_call.1} parent=5 // pred_fallthru
        _
      %p152 = scmp.lt.s32.totalorder %s19, 8
      // Predicated region
      $region13: #{tpu_custom_call.1} parent=5 // pred_check
        %p153 = pneg %p152
      $region14: #{tpu_custom_call.1} parent=5 // pred_check_branch
        %155 = sbr.rel (%p153) target = $region16
      $region15: #{tpu_custom_call.1} parent=5 // pred_region
        // Predicated region
        $region17: #{tpu_custom_call.1} parent=15 // pred_check
          %p156 = pneg %p53
        $region18: #{tpu_custom_call.1} parent=15 // pred_check_branch
          %158 = sbr.rel (%p156) target = $region20
        $region19: #{tpu_custom_call.1} parent=15 // pred_region
          %s159 = sand.u32 %s43, 1
          %s160 = scalar_lea.sflag [#allocation3], %s159
          %s161 = sand.u32 %s43, 1
          %s162 = smul.addr %s161, 128
          %s163 = scalar_lea.vmem [#allocation2], %s162
          %s164 = smul.u32 8, %s27
          %s166 = ssub.s32 2048, 2048
          %167 = vsyncadd %s160, %s166
          %s168 = smul.addr %s164, 2
          %s169 = smul.addr %s26, 64
          %s170 = sadd.s32 %s168, %s169
          %s171 = smul.addr %s170, 128
          %s172 = scalar_lea.hbm %s0, %s171
          %s173 = sshll.u32 %s163, 4
          %s174 = int_to_ptr.vmem [resolvable:$true] %s173
          %179 = dma.hbm_to_vmem [thread:$0]  %s172, 2048, %s174, %s160, 256, 256, 16
        $region20: #{tpu_custom_call.1} parent=15 // pred_fallthru
          _
      $region16: #{tpu_custom_call.1} parent=5 // pred_fallthru
        _
      %p180 = scmp.le.s32.totalorder 1, %s19
      %p181 = scmp.lt.s32.totalorder %s19, 9
      %p182 = pnand %p180, %p181
      %p183 = pneg %p182
      // Predicated region
      $region21: #{tpu_custom_call.1} parent=5 // pred_check
        _
      $region22: #{tpu_custom_call.1} parent=5 // pred_check_branch
        %185 = sbr.rel (%p182) target = $region24
      $region23: #{tpu_custom_call.1} parent=5 // pred_region
        %s186 = ssub.s32 %s19, 1
        %s187 = sand.u32 %s46, 1
        %s188 = scalar_lea.sflag [#allocation3], %s187
        %s189 = sand.u32 %s46, 1
        %s190 = smul.addr %s189, 128
        %s191 = scalar_lea.vmem [#allocation2], %s190
        // Predicated region
        $region25: #{tpu_custom_call.1} parent=23 // pred_check
          %p192 = pneg %p59
        $region26: #{tpu_custom_call.1} parent=23 // pred_check_branch
          %194 = sbr.rel (%p192) target = $region28
        $region27: #{tpu_custom_call.1} parent=23 // pred_region
          %195 = dma.done %s188, 2048
        $region28: #{tpu_custom_call.1} parent=23 // pred_fallthru
          _
        %s196 = sand.u32 %s46, 1
        %s197 = scalar_lea.sflag [#allocation3], %s196
        %s198 = sand.u32 %s46, 1
        %s199 = smul.addr %s198, 128
        %s200 = scalar_lea.vmem [#allocation2], %s199
        %p201 = pneg %p59
        %p202 = pneg %p56
        %p203 = pneg %p85
        %p204 = pneg %p82
        %s205 = sand.u32 %s72, 1
        %s206 = scalar_lea.sflag [#allocation4], %s205
        %s207 = sand.u32 %s72, 1
        %s208 = smul.addr %s207, 2
        %s209 = scalar_lea.vmem [#allocation5], %s208
        %p210 = pneg %p111
        %p211 = pneg %p108
        %s212 = sand.u32 %s98, 1
        %s213 = scalar_lea.sflag [#allocation7], %s212
        %s214 = sand.u32 %s98, 1
        %s215 = smul.addr %s214, 512
        %s216 = scalar_lea.vmem [#allocation6], %s215
        %p217 = pneg %p137
        %p218 = pneg %p134
        %p219 = scmp.lt.s32.totalorder %s28, 1
        %s220 = scalar_select %p219, %s28, 1
        %s221 = scalar_lea.vmem %s3, %s220
        %s222 = smul.u32 8, %s29
        %p223 = scmp.lt.s32.totalorder %s28, 1
        %s224 = scalar_select %p223, %s28, 1
        %s225 = scalar_lea.vmem %s3, %s224
        %p226 = scmp.eq.s32.totalorder %s29, 0
        // Predicated region
        $region29: #{tpu_custom_call.1} parent=23 // pred_check
          %p227 = pneg %p226
        $region30: #{tpu_custom_call.1} parent=23 // pred_check_branch
          %229 = sbr.rel (%p227) target = $region32
        $region31: #{tpu_custom_call.1} parent=23 // pred_region
          %v230 = vlaneseq
          %vm231 = vcmp.ge.s32.totalorder %v230, 0
          %vm232 = vcmp.lt.s32.totalorder %v230, 256
          %vm233 = vmand %vm231, %vm232
          %234 = vst.msk [vmem:[%s209] sm:$0x3] %vm233, 0.0
          %235 = vst [vmem:[%s216] sm:$0xff] 0.0
          %236 = vst [vmem:[%s216 + $0x8] sm:$0xff] 0.0
          %237 = vst [vmem:[%s216 + $0x10] sm:$0xff] 0.0
          %238 = vst [vmem:[%s216 + $0x18] sm:$0xff] 0.0
          %239 = vst [vmem:[%s216 + $0x20] sm:$0xff] 0.0
          %240 = vst [vmem:[%s216 + $0x28] sm:$0xff] 0.0
          %241 = vst [vmem:[%s216 + $0x30] sm:$0xff] 0.0
          %242 = vst [vmem:[%s216 + $0x38] sm:$0xff] 0.0
          %243 = vst [vmem:[%s216 + $0x40] sm:$0xff] 0.0
          %244 = vst [vmem:[%s216 + $0x48] sm:$0xff] 0.0
          %245 = vst [vmem:[%s216 + $0x50] sm:$0xff] 0.0
          %246 = vst [vmem:[%s216 + $0x58] sm:$0xff] 0.0
          %247 = vst [vmem:[%s216 + $0x60] sm:$0xff] 0.0
          %248 = vst [vmem:[%s216 + $0x68] sm:$0xff] 0.0
          %249 = vst [vmem:[%s216 + $0x70] sm:$0xff] 0.0
          %250 = vst [vmem:[%s216 + $0x78] sm:$0xff] 0.0
          %251 = vst [vmem:[%s216 + $0x80] sm:$0xff] 0.0
          %252 = vst [vmem:[%s216 + $0x88] sm:$0xff] 0.0
          %253 = vst [vmem:[%s216 + $0x90] sm:$0xff] 0.0
          %254 = vst [vmem:[%s216 + $0x98] sm:$0xff] 0.0
          %255 = vst [vmem:[%s216 + $0xa0] sm:$0xff] 0.0
          %256 = vst [vmem:[%s216 + $0xa8] sm:$0xff] 0.0
          %257 = vst [vmem:[%s216 + $0xb0] sm:$0xff] 0.0
          %258 = vst [vmem:[%s216 + $0xb8] sm:$0xff] 0.0
          %259 = vst [vmem:[%s216 + $0xc0] sm:$0xff] 0.0
          %260 = vst [vmem:[%s216 + $0xc8] sm:$0xff] 0.0
          %261 = vst [vmem:[%s216 + $0xd0] sm:$0xff] 0.0
          %262 = vst [vmem:[%s216 + $0xd8] sm:$0xff] 0.0
          %263 = vst [vmem:[%s216 + $0xe0] sm:$0xff] 0.0
          %264 = vst [vmem:[%s216 + $0xe8] sm:$0xff] 0.0
          %265 = vst [vmem:[%s216 + $0xf0] sm:$0xff] 0.0
          %266 = vst [vmem:[%s216 + $0xf8] sm:$0xff] 0.0
          %267 = vst [vmem:[%s216 + $0x100] sm:$0xff] 0.0
          %268 = vst [vmem:[%s216 + $0x108] sm:$0xff] 0.0
          %269 = vst [vmem:[%s216 + $0x110] sm:$0xff] 0.0
          %270 = vst [vmem:[%s216 + $0x118] sm:$0xff] 0.0
          %271 = vst [vmem:[%s216 + $0x120] sm:$0xff] 0.0
          %272 = vst [vmem:[%s216 + $0x128] sm:$0xff] 0.0
          %273 = vst [vmem:[%s216 + $0x130] sm:$0xff] 0.0
          %274 = vst [vmem:[%s216 + $0x138] sm:$0xff] 0.0
          %275 = vst [vmem:[%s216 + $0x140] sm:$0xff] 0.0
          %276 = vst [vmem:[%s216 + $0x148] sm:$0xff] 0.0
          %277 = vst [vmem:[%s216 + $0x150] sm:$0xff] 0.0
          %278 = vst [vmem:[%s216 + $0x158] sm:$0xff] 0.0
          %279 = vst [vmem:[%s216 + $0x160] sm:$0xff] 0.0
          %280 = vst [vmem:[%s216 + $0x168] sm:$0xff] 0.0
          %281 = vst [vmem:[%s216 + $0x170] sm:$0xff] 0.0
          %282 = vst [vmem:[%s216 + $0x178] sm:$0xff] 0.0
          %283 = vst [vmem:[%s216 + $0x180] sm:$0xff] 0.0
          %284 = vst [vmem:[%s216 + $0x188] sm:$0xff] 0.0
          %285 = vst [vmem:[%s216 + $0x190] sm:$0xff] 0.0
          %286 = vst [vmem:[%s216 + $0x198] sm:$0xff] 0.0
          %287 = vst [vmem:[%s216 + $0x1a0] sm:$0xff] 0.0
          %288 = vst [vmem:[%s216 + $0x1a8] sm:$0xff] 0.0
          %289 = vst [vmem:[%s216 + $0x1b0] sm:$0xff] 0.0
          %290 = vst [vmem:[%s216 + $0x1b8] sm:$0xff] 0.0
          %291 = vst [vmem:[%s216 + $0x1c0] sm:$0xff] 0.0
          %292 = vst [vmem:[%s216 + $0x1c8] sm:$0xff] 0.0
          %293 = vst [vmem:[%s216 + $0x1d0] sm:$0xff] 0.0
          %294 = vst [vmem:[%s216 + $0x1d8] sm:$0xff] 0.0
          %295 = vst [vmem:[%s216 + $0x1e0] sm:$0xff] 0.0
          %296 = vst [vmem:[%s216 + $0x1e8] sm:$0xff] 0.0
          %297 = vst [vmem:[%s216 + $0x1f0] sm:$0xff] 0.0
          %298 = vst [vmem:[%s216 + $0x1f8] sm:$0xff] 0.0
          %vm299 = vcmask 0
          %300 = vst.msk [vmem:[%s225] sm:$0x1] %vm299, 0.0
        $region32: #{tpu_custom_call.1} parent=23 // pred_fallthru
          _
        %v301 = vld [vmem:[%s191] sm:$0xff]
        %v302 = vld [vmem:[%s191 + $0x8] sm:$0xff]
        %v303 = vld [vmem:[%s191 + $0x10] sm:$0xff]
        %v304 = vld [vmem:[%s191 + $0x18] sm:$0xff]
        %v305 = vld [vmem:[%s191 + $0x20] sm:$0xff]
        %v306 = vld [vmem:[%s191 + $0x28] sm:$0xff]
        %v307 = vld [vmem:[%s191 + $0x30] sm:$0xff]
        %v308 = vld [vmem:[%s191 + $0x38] sm:$0xff]
        %v309 = vld [vmem:[%s191 + $0x40] sm:$0xff]
        %v310 = vld [vmem:[%s191 + $0x48] sm:$0xff]
        %v311 = vld [vmem:[%s191 + $0x50] sm:$0xff]
        %v312 = vld [vmem:[%s191 + $0x58] sm:$0xff]
        %v313 = vld [vmem:[%s191 + $0x60] sm:$0xff]
        %v314 = vld [vmem:[%s191 + $0x68] sm:$0xff]
        %v315 = vld [vmem:[%s191 + $0x70] sm:$0xff]
        %v316 = vld [vmem:[%s191 + $0x78] sm:$0xff]
        %v317 = vld [vmem:[%s209] sm:$0x3]
        %v318 = vadd.f32 %v301, %v303
        %v319 = vadd.f32 %v318, %v305
        %v320 = vadd.f32 %v319, %v307
        %v321 = vadd.f32 %v320, %v309
        %v322 = vadd.f32 %v321, %v311
        %v323 = vadd.f32 %v322, %v313
        %v324 = vadd.f32 %v323, %v315
        %v325 = vrot.slane %v324, 4
        %v326 = vadd.f32 %v324, %v325
        %v327 = vrot.slane %v326, 2
        %v328 = vadd.f32 %v326, %v327
        %v329 = vrot.slane %v328, 1
        %v330 = vadd.f32 %v328, %v329
        %v331 = vadd.f32 %v302, %v304
        %v332 = vadd.f32 %v331, %v306
        %v333 = vadd.f32 %v332, %v308
        %v334 = vadd.f32 %v333, %v310
        %v335 = vadd.f32 %v334, %v312
        %v336 = vadd.f32 %v335, %v314
        %v337 = vadd.f32 %v336, %v316
        %v338 = vrot.slane %v337, 4
        %v339 = vadd.f32 %v337, %v338
        %v340 = vrot.slane %v339, 2
        %v341 = vadd.f32 %v339, %v340
        %v342 = vrot.slane %v341, 1
        %v343 = vadd.f32 %v341, %v342
        %v346 = vcombine.low %v330, %v343
        %v348 = vunpack.c.l.s4 1966171168
        %v349 = vunpack.c.0.s8 %v348
        %v350 = vlaneseq
        %v351 = vshrl.u32 %v350, 7
        %v352 = vsub.s32 %v349, %v351
        %v353 = vrot.slane %v346, %v352
        %v355 = vunpack.c.l.s4 1966171168
        %v356 = vunpack.c.0.s8 %v355
        %v357 = vlaneseq
        %v358 = vshrl.u32 %v357, 7
        %v359 = vsub.s32 %v356, %v358
        %v360 = vrot.slane %v353, %v359
        %v362 = vadd.f32 %v317, %v360
        %v363 = vlaneseq
        %vm364 = vcmp.ge.s32.totalorder %v363, 0
        %vm365 = vcmp.lt.s32.totalorder %v363, 256
        %vm366 = vmand %vm364, %vm365
        %367 = vst.msk [vmem:[%s209] sm:$0x3] %vm366, %v362
        %v368 = vld [vmem:[%s225] sm:$0x1]
        %v369 = vmul.f32 %v301, %v301
        %v370 = vmul.f32 %v302, %v302
        %v371 = vmul.f32 %v303, %v303
        %v372 = vmul.f32 %v304, %v304
        %v373 = vmul.f32 %v305, %v305
        %v374 = vmul.f32 %v306, %v306
        %v375 = vmul.f32 %v307, %v307
        %v376 = vmul.f32 %v308, %v308
        %v377 = vmul.f32 %v309, %v309
        %v378 = vmul.f32 %v310, %v310
        %v379 = vmul.f32 %v311, %v311
        %v380 = vmul.f32 %v312, %v312
        %v381 = vmul.f32 %v313, %v313
        %v382 = vmul.f32 %v314, %v314
        %v383 = vmul.f32 %v315, %v315
        %v384 = vmul.f32 %v316, %v316
        %v385 = vadd.f32 %v369, %v370
        %v386 = vadd.f32 %v385, %v371
        %v387 = vadd.f32 %v386, %v372
        %v388 = vadd.f32 %v387, %v373
        %v389 = vadd.f32 %v388, %v374
        %v390 = vadd.f32 %v389, %v375
        %v391 = vadd.f32 %v390, %v376
        %v392 = vadd.f32 %v391, %v377
        %v393 = vadd.f32 %v392, %v378
        %v394 = vadd.f32 %v393, %v379
        %v395 = vadd.f32 %v394, %v380
        %v396 = vadd.f32 %v395, %v381
        %v397 = vadd.f32 %v396, %v382
        %v398 = vadd.f32 %v397, %v383
        %v399 = vadd.f32 %v398, %v384
        %400 = vadd.xlane.f32.xlu0 %v399
        %v401 = vpop.xlane.xlu0 %400
        %v402 = vrot.slane %v401, 4
        %v403 = vadd.f32 %v401, %v402
        %v404 = vrot.slane %v403, 2
        %v405 = vadd.f32 %v403, %v404
        %v406 = vrot.slane %v405, 1
        %v407 = vadd.f32 %v405, %v406
        %s408 = vtos %v407
        %v409 = vstv %s408
        %v410 = vadd.f32 %v368, %v409
        %vm411 = vcmask 0
        %412 = vst.msk [vmem:[%s225] sm:$0x1] %vm411, %v410
        %v413 = vld [vmem:[%s216] sm:$0xff]
        %v414 = vld [vmem:[%s216 + $0x8] sm:$0xff]
        %v415 = vld [vmem:[%s216 + $0x10] sm:$0xff]
        %v416 = vld [vmem:[%s216 + $0x18] sm:$0xff]
        %v417 = vld [vmem:[%s216 + $0x20] sm:$0xff]
        %v418 = vld [vmem:[%s216 + $0x28] sm:$0xff]
        %v419 = vld [vmem:[%s216 + $0x30] sm:$0xff]
        %v420 = vld [vmem:[%s216 + $0x38] sm:$0xff]
        %v421 = vld [vmem:[%s216 + $0x40] sm:$0xff]
        %v422 = vld [vmem:[%s216 + $0x48] sm:$0xff]
        %v423 = vld [vmem:[%s216 + $0x50] sm:$0xff]
        %v424 = vld [vmem:[%s216 + $0x58] sm:$0xff]
        %v425 = vld [vmem:[%s216 + $0x60] sm:$0xff]
        %v426 = vld [vmem:[%s216 + $0x68] sm:$0xff]
        %v427 = vld [vmem:[%s216 + $0x70] sm:$0xff]
        %v428 = vld [vmem:[%s216 + $0x78] sm:$0xff]
        %v429 = vld [vmem:[%s216 + $0x80] sm:$0xff]
        %v430 = vld [vmem:[%s216 + $0x88] sm:$0xff]
        %v431 = vld [vmem:[%s216 + $0x90] sm:$0xff]
        %v432 = vld [vmem:[%s216 + $0x98] sm:$0xff]
        %v433 = vld [vmem:[%s216 + $0xa0] sm:$0xff]
        %v434 = vld [vmem:[%s216 + $0xa8] sm:$0xff]
        %v435 = vld [vmem:[%s216 + $0xb0] sm:$0xff]
        %v436 = vld [vmem:[%s216 + $0xb8] sm:$0xff]
        %v437 = vld [vmem:[%s216 + $0xc0] sm:$0xff]
        %v438 = vld [vmem:[%s216 + $0xc8] sm:$0xff]
        %v439 = vld [vmem:[%s216 + $0xd0] sm:$0xff]
        %v440 = vld [vmem:[%s216 + $0xd8] sm:$0xff]
        %v441 = vld [vmem:[%s216 + $0xe0] sm:$0xff]
        %v442 = vld [vmem:[%s216 + $0xe8] sm:$0xff]
        %v443 = vld [vmem:[%s216 + $0xf0] sm:$0xff]
        %v444 = vld [vmem:[%s216 + $0xf8] sm:$0xff]
        %v445 = vld [vmem:[%s216 + $0x100] sm:$0xff]
        %v446 = vld [vmem:[%s216 + $0x108] sm:$0xff]
        %v447 = vld [vmem:[%s216 + $0x110] sm:$0xff]
        %v448 = vld [vmem:[%s216 + $0x118] sm:$0xff]
        %v449 = vld [vmem:[%s216 + $0x120] sm:$0xff]
        %v450 = vld [vmem:[%s216 + $0x128] sm:$0xff]
        %v451 = vld [vmem:[%s216 + $0x130] sm:$0xff]
        %v452 = vld [vmem:[%s216 + $0x138] sm:$0xff]
        %v453 = vld [vmem:[%s216 + $0x140] sm:$0xff]
        %v454 = vld [vmem:[%s216 + $0x148] sm:$0xff]
        %v455 = vld [vmem:[%s216 + $0x150] sm:$0xff]
        %v456 = vld [vmem:[%s216 + $0x158] sm:$0xff]
        %v457 = vld [vmem:[%s216 + $0x160] sm:$0xff]
        %v458 = vld [vmem:[%s216 + $0x168] sm:$0xff]
        %v459 = vld [vmem:[%s216 + $0x170] sm:$0xff]
        %v460 = vld [vmem:[%s216 + $0x178] sm:$0xff]
        %v461 = vld [vmem:[%s216 + $0x180] sm:$0xff]
        %v462 = vld [vmem:[%s216 + $0x188] sm:$0xff]
        %v463 = vld [vmem:[%s216 + $0x190] sm:$0xff]
        %v464 = vld [vmem:[%s216 + $0x198] sm:$0xff]
        %v465 = vld [vmem:[%s216 + $0x1a0] sm:$0xff]
        %v466 = vld [vmem:[%s216 + $0x1a8] sm:$0xff]
        %v467 = vld [vmem:[%s216 + $0x1b0] sm:$0xff]
        %v468 = vld [vmem:[%s216 + $0x1b8] sm:$0xff]
        %v469 = vld [vmem:[%s216 + $0x1c0] sm:$0xff]
        %v470 = vld [vmem:[%s216 + $0x1c8] sm:$0xff]
        %v471 = vld [vmem:[%s216 + $0x1d0] sm:$0xff]
        %v472 = vld [vmem:[%s216 + $0x1d8] sm:$0xff]
        %v473 = vld [vmem:[%s216 + $0x1e0] sm:$0xff]
        %v474 = vld [vmem:[%s216 + $0x1e8] sm:$0xff]
        %v475 = vld [vmem:[%s216 + $0x1f0] sm:$0xff]
        %v476 = vld [vmem:[%s216 + $0x1f8] sm:$0xff]
        %477 = vxpose.xlu0.b32.start [1/16] %v301, 128
        %478 = vxpose.xlu0.b32.cont [2/16] %v303, 128
        %479 = vxpose.xlu0.b32.cont [3/16] %v305, 128
        %480 = vxpose.xlu0.b32.cont [4/16] %v307, 128
        %481 = vxpose.xlu0.b32.cont [5/16] %v309, 128
        %482 = vxpose.xlu0.b32.cont [6/16] %v311, 128
        %483 = vxpose.xlu0.b32.cont [7/16] %v313, 128
        %484 = vxpose.xlu0.b32.cont [8/16] %v315, 128
        %485 = vxpose.xlu0.b32.cont [9/16] 0.0, 128
        %486 = vxpose.xlu0.b32.cont [10/16] 0.0, 128
        %487 = vxpose.xlu0.b32.cont [11/16] 0.0, 128
        %488 = vxpose.xlu0.b32.cont [12/16] 0.0, 128
        %489 = vxpose.xlu0.b32.cont [13/16] 0.0, 128
        %490 = vxpose.xlu0.b32.cont [14/16] 0.0, 128
        %491 = vxpose.xlu0.b32.cont [15/16] 0.0, 128
        %492 = vxpose.xlu0.b32.end [16/16] 0.0, 128
        %v493 = vpop.trf.xlu0
        %v494 = vpop.trf.xlu0
        %v495 = vpop.trf.xlu0
        %v496 = vpop.trf.xlu0
        %v497 = vpop.trf.xlu0
        %v498 = vpop.trf.xlu0
        %v499 = vpop.trf.xlu0
        %v500 = vpop.trf.xlu0
        %v501 = vpop.trf.xlu0
        %v502 = vpop.trf.xlu0
        %v503 = vpop.trf.xlu0
        %v504 = vpop.trf.xlu0
        %v505 = vpop.trf.xlu0
        %v506 = vpop.trf.xlu0
        %v507 = vpop.trf.xlu0
        %v508 = vpop.trf.xlu0
        %509 = vxpose.xlu0.b32.start [1/16] %v302, 128
        %510 = vxpose.xlu0.b32.cont [2/16] %v304, 128
        %511 = vxpose.xlu0.b32.cont [3/16] %v306, 128
        %512 = vxpose.xlu0.b32.cont [4/16] %v308, 128
        %513 = vxpose.xlu0.b32.cont [5/16] %v310, 128
        %514 = vxpose.xlu0.b32.cont [6/16] %v312, 128
        %515 = vxpose.xlu0.b32.cont [7/16] %v314, 128
        %516 = vxpose.xlu0.b32.cont [8/16] %v316, 128
        %517 = vxpose.xlu0.b32.cont [9/16] 0.0, 128
        %518 = vxpose.xlu0.b32.cont [10/16] 0.0, 128
        %519 = vxpose.xlu0.b32.cont [11/16] 0.0, 128
        %520 = vxpose.xlu0.b32.cont [12/16] 0.0, 128
        %521 = vxpose.xlu0.b32.cont [13/16] 0.0, 128
        %522 = vxpose.xlu0.b32.cont [14/16] 0.0, 128
        %523 = vxpose.xlu0.b32.cont [15/16] 0.0, 128
        %524 = vxpose.xlu0.b32.end [16/16] 0.0, 128
        %v525 = vpop.trf.xlu0
        %v526 = vpop.trf.xlu0
        %v527 = vpop.trf.xlu0
        %v528 = vpop.trf.xlu0
        %v529 = vpop.trf.xlu0
        %v530 = vpop.trf.xlu0
        %v531 = vpop.trf.xlu0
        %v532 = vpop.trf.xlu0
        %v533 = vpop.trf.xlu0
        %v534 = vpop.trf.xlu0
        %v535 = vpop.trf.xlu0
        %v536 = vpop.trf.xlu0
        %v537 = vpop.trf.xlu0
        %v538 = vpop.trf.xlu0
        %v539 = vpop.trf.xlu0
        %v540 = vpop.trf.xlu0
        %vm541 = vcmask 523264
        %v543 = vsel %vm541, %v493, 0
        %v546 = vsel %vm541, %v494, 0
        %v549 = vsel %vm541, %v495, 0
        %v552 = vsel %vm541, %v496, 0
        %v555 = vsel %vm541, %v497, 0
        %v558 = vsel %vm541, %v498, 0
        %v561 = vsel %vm541, %v499, 0
        %v564 = vsel %vm541, %v500, 0
        %v567 = vsel %vm541, %v501, 0
        %v570 = vsel %vm541, %v502, 0
        %v573 = vsel %vm541, %v503, 0
        %v576 = vsel %vm541, %v504, 0
        %v579 = vsel %vm541, %v505, 0
        %v582 = vsel %vm541, %v506, 0
        %v585 = vsel %vm541, %v507, 0
        %v588 = vsel %vm541, %v508, 0
        %v591 = vsel %vm541, %v525, 0
        %v594 = vsel %vm541, %v526, 0
        %v597 = vsel %vm541, %v527, 0
        %v600 = vsel %vm541, %v528, 0
        %v603 = vsel %vm541, %v529, 0
        %v606 = vsel %vm541, %v530, 0
        %v609 = vsel %vm541, %v531, 0
        %v612 = vsel %vm541, %v532, 0
        %v615 = vsel %vm541, %v533, 0
        %v618 = vsel %vm541, %v534, 0
        %v621 = vsel %vm541, %v535, 0
        %v624 = vsel %vm541, %v536, 0
        %v627 = vsel %vm541, %v537, 0
        %v630 = vsel %vm541, %v538, 0
        %v633 = vsel %vm541, %v539, 0
        %v636 = vsel %vm541, %v540, 0
        %638 = vmatprep.subr.mxu0 %v302
        %639 = vmatpush1.msra.mxu0 %v301
        %640 = vmatprep.subr.mxu0 %v304
        %641 = vmatpush1.msra.mxu0 %v303
        %642 = vmatprep.subr.mxu0 %v306
        %643 = vmatpush1.msra.mxu0 %v305
        %644 = vmatprep.subr.mxu0 %v308
        %645 = vmatpush1.msra.mxu0 %v307
        %646 = vmatprep.subr.mxu0 %v310
        %647 = vmatpush1.msra.mxu0 %v309
        %648 = vmatprep.subr.mxu0 %v312
        %649 = vmatpush1.msra.mxu0 %v311
        %650 = vmatprep.subr.mxu0 %v314
        %651 = vmatpush1.msra.mxu0 %v313
        %652 = vmatprep.subr.mxu0 %v316
        %653 = vmatpush1.msra.mxu0 %v315
        %654 = vmatprep.subr.mxu0 0.0
        %655 = vmatpush1.msra.mxu0 0.0
        %656 = vmatprep.subr.mxu0 0.0
        %657 = vmatpush1.msra.mxu0 0.0
        %658 = vmatprep.subr.mxu0 0.0
        %659 = vmatpush1.msra.mxu0 0.0
        %660 = vmatprep.subr.mxu0 0.0
        %661 = vmatpush1.msra.mxu0 0.0
        %662 = vmatprep.subr.mxu0 0.0
        %663 = vmatpush1.msra.mxu0 0.0
        %664 = vmatprep.subr.mxu0 0.0
        %665 = vmatpush1.msra.mxu0 0.0
        %666 = vmatprep.subr.mxu0 0.0
        %667 = vmatpush1.msra.mxu0 0.0
        %668 = vmatprep.subr.mxu0 0.0
        %669 = vmatpush1.msra.mxu0 0.0
        %670 = vmatprep.subr.mxu0 0.0
        %671 = vmatpush1.msra.mxu0 0.0
        %672 = vmatprep.subr.mxu0 0.0
        %673 = vmatpush1.msra.mxu0 0.0
        %674 = vmatprep.subr.mxu0 0.0
        %675 = vmatpush1.msra.mxu0 0.0
        %676 = vmatprep.subr.mxu0 0.0
        %677 = vmatpush1.msra.mxu0 0.0
        %678 = vmatprep.subr.mxu0 0.0
        %679 = vmatpush1.msra.mxu0 0.0
        %680 = vmatprep.subr.mxu0 0.0
        %681 = vmatpush1.msra.mxu0 0.0
        %682 = vmatprep.subr.mxu0 0.0
        %683 = vmatpush1.msra.mxu0 0.0
        %684 = vmatprep.subr.mxu0 0.0
        %685 = vmatpush1.msra.mxu0 0.0
        %686 = vmatprep.subr.mxu0 0.0
        %687 = vmatpush1.msra.mxu0 0.0
        %688 = vmatprep.subr.mxu0 0.0
        %689 = vmatpush1.msra.mxu0 0.0
        %690 = vmatprep.subr.mxu0 0.0
        %691 = vmatpush1.msra.mxu0 0.0
        %692 = vmatprep.subr.mxu0 0.0
        %693 = vmatpush1.msra.mxu0 0.0
        %694 = vmatprep.subr.mxu0 0.0
        %695 = vmatpush1.msra.mxu0 0.0
        %696 = vmatprep.subr.mxu0 0.0
        %697 = vmatpush1.msra.mxu0 0.0
        %698 = vmatprep.subr.mxu0 0.0
        %699 = vmatpush1.msra.mxu0 0.0
        %700 = vmatprep.subr.mxu0 0.0
        %701 = vmatpush1.msra.mxu0 0.0
        %702 = vmatprep.mubr.f32.mxu0 0.0
        %703 = vmatmul.mubr.f32.gmra.mrb[0].mxu0 %v543
        %v704 = vpop.f32.mrb[0].mxu0
        %v705 = vadd.f32 0.0, %v704
        %v706 = vpop.f32.mrb[0].mxu0
        %v707 = vadd.f32 0.0, %v706
        %708 = vmatprep.mubr.f32.mxu0 0.0
        %709 = vmatmul.mubr.f32.gmra.mrb[0].mxu0 %v546
        %v710 = vpop.f32.mrb[0].mxu0
        %v711 = vadd.f32 0.0, %v710
        %v712 = vpop.f32.mrb[0].mxu0
        %v713 = vadd.f32 0.0, %v712
        %714 = vmatprep.mubr.f32.mxu0 0.0
        %715 = vmatmul.mubr.f32.gmra.mrb[0].mxu0 %v549
        %v716 = vpop.f32.mrb[0].mxu0
        %v717 = vadd.f32 0.0, %v716
        %v718 = vpop.f32.mrb[0].mxu0
        %v719 = vadd.f32 0.0, %v718
        %720 = vmatprep.mubr.f32.mxu0 0.0
        %721 = vmatmul.mubr.f32.gmra.mrb[0].mxu0 %v552
        %v722 = vpop.f32.mrb[0].mxu0
        %v723 = vadd.f32 0.0, %v722
        %v724 = vpop.f32.mrb[0].mxu0
        %v725 = vadd.f32 0.0, %v724
        %726 = vmatprep.mubr.f32.mxu0 0.0
        %727 = vmatmul.mubr.f32.gmra.mrb[0].mxu0 %v555
        %v728 = vpop.f32.mrb[0].mxu0
        %v729 = vadd.f32 0.0, %v728
        %v730 = vpop.f32.mrb[0].mxu0
        %v731 = vadd.f32 0.0, %v730
        %732 = vmatprep.mubr.f32.mxu0 0.0
        %733 = vmatmul.mubr.f32.gmra.mrb[0].mxu0 %v558
        %v734 = vpop.f32.mrb[0].mxu0
        %v735 = vadd.f32 0.0, %v734
        %v736 = vpop.f32.mrb[0].mxu0
        %v737 = vadd.f32 0.0, %v736
        %738 = vmatprep.mubr.f32.mxu0 0.0
        %739 = vmatmul.mubr.f32.gmra.mrb[0].mxu0 %v561
        %v740 = vpop.f32.mrb[0].mxu0
        %v741 = vadd.f32 0.0, %v740
        %v742 = vpop.f32.mrb[0].mxu0
        %v743 = vadd.f32 0.0, %v742
        %744 = vmatprep.mubr.f32.mxu0 0.0
        %745 = vmatmul.mubr.f32.gmra.mrb[0].mxu0 %v564
        %v746 = vpop.f32.mrb[0].mxu0
        %v747 = vadd.f32 0.0, %v746
        %v748 = vpop.f32.mrb[0].mxu0
        %v749 = vadd.f32 0.0, %v748
        %750 = vmatprep.mubr.f32.mxu0 0.0
        %751 = vmatmul.mubr.f32.gmra.mrb[0].mxu0 %v567
        %v752 = vpop.f32.mrb[0].mxu0
        %v753 = vadd.f32 0.0, %v752
        %v754 = vpop.f32.mrb[0].mxu0
        %v755 = vadd.f32 0.0, %v754
        %756 = vmatprep.mubr.f32.mxu0 0.0
        %757 = vmatmul.mubr.f32.gmra.mrb[0].mxu0 %v570
        %v758 = vpop.f32.mrb[0].mxu0
        %v759 = vadd.f32 0.0, %v758
        %v760 = vpop.f32.mrb[0].mxu0
        %v761 = vadd.f32 0.0, %v760
        %762 = vmatprep.mubr.f32.mxu0 0.0
        %763 = vmatmul.mubr.f32.gmra.mrb[0].mxu0 %v573
        %v764 = vpop.f32.mrb[0].mxu0
        %v765 = vadd.f32 0.0, %v764
        %v766 = vpop.f32.mrb[0].mxu0
        %v767 = vadd.f32 0.0, %v766
        %768 = vmatprep.mubr.f32.mxu0 0.0
        %769 = vmatmul.mubr.f32.gmra.mrb[0].mxu0 %v576
        %v770 = vpop.f32.mrb[0].mxu0
        %v771 = vadd.f32 0.0, %v770
        %v772 = vpop.f32.mrb[0].mxu0
        %v773 = vadd.f32 0.0, %v772
        %774 = vmatprep.mubr.f32.mxu0 0.0
        %775 = vmatmul.mubr.f32.gmra.mrb[0].mxu0 %v579
        %v776 = vpop.f32.mrb[0].mxu0
        %v777 = vadd.f32 0.0, %v776
        %v778 = vpop.f32.mrb[0].mxu0
        %v779 = vadd.f32 0.0, %v778
        %780 = vmatprep.mubr.f32.mxu0 0.0
        %781 = vmatmul.mubr.f32.gmra.mrb[0].mxu0 %v582
        %v782 = vpop.f32.mrb[0].mxu0
        %v783 = vadd.f32 0.0, %v782
        %v784 = vpop.f32.mrb[0].mxu0
        %v785 = vadd.f32 0.0, %v784
        %786 = vmatprep.mubr.f32.mxu0 0.0
        %787 = vmatmul.mubr.f32.gmra.mrb[0].mxu0 %v585
        %v788 = vpop.f32.mrb[0].mxu0
        %v789 = vadd.f32 0.0, %v788
        %v790 = vpop.f32.mrb[0].mxu0
        %v791 = vadd.f32 0.0, %v790
        %792 = vmatprep.mubr.f32.mxu0 0.0
        %793 = vmatmul.mubr.f32.gmra.mrb[0].mxu0 %v588
        %v794 = vpop.f32.mrb[0].mxu0
        %v795 = vadd.f32 0.0, %v794
        %v796 = vpop.f32.mrb[0].mxu0
        %v797 = vadd.f32 0.0, %v796
        %798 = vmatprep.mubr.f32.mxu0 0.0
        %799 = vmatmul.mubr.f32.gmra.mrb[0].mxu0 %v591
        %v800 = vpop.f32.mrb[0].mxu0
        %v801 = vadd.f32 0.0, %v800
        %v802 = vpop.f32.mrb[0].mxu0
        %v803 = vadd.f32 0.0, %v802
        %804 = vmatprep.mubr.f32.mxu0 0.0
        %805 = vmatmul.mubr.f32.gmra.mrb[0].mxu0 %v594
        %v806 = vpop.f32.mrb[0].mxu0
        %v807 = vadd.f32 0.0, %v806
        %v808 = vpop.f32.mrb[0].mxu0
        %v809 = vadd.f32 0.0, %v808
        %810 = vmatprep.mubr.f32.mxu0 0.0
        %811 = vmatmul.mubr.f32.gmra.mrb[0].mxu0 %v597
        %v812 = vpop.f32.mrb[0].mxu0
        %v813 = vadd.f32 0.0, %v812
        %v814 = vpop.f32.mrb[0].mxu0
        %v815 = vadd.f32 0.0, %v814
        %816 = vmatprep.mubr.f32.mxu0 0.0
        %817 = vmatmul.mubr.f32.gmra.mrb[0].mxu0 %v600
        %v818 = vpop.f32.mrb[0].mxu0
        %v819 = vadd.f32 0.0, %v818
        %v820 = vpop.f32.mrb[0].mxu0
        %v821 = vadd.f32 0.0, %v820
        %822 = vmatprep.mubr.f32.mxu0 0.0
        %823 = vmatmul.mubr.f32.gmra.mrb[0].mxu0 %v603
        %v824 = vpop.f32.mrb[0].mxu0
        %v825 = vadd.f32 0.0, %v824
        %v826 = vpop.f32.mrb[0].mxu0
        %v827 = vadd.f32 0.0, %v826
        %828 = vmatprep.mubr.f32.mxu0 0.0
        %829 = vmatmul.mubr.f32.gmra.mrb[0].mxu0 %v606
        %v830 = vpop.f32.mrb[0].mxu0
        %v831 = vadd.f32 0.0, %v830
        %v832 = vpop.f32.mrb[0].mxu0
        %v833 = vadd.f32 0.0, %v832
        %834 = vmatprep.mubr.f32.mxu0 0.0
        %835 = vmatmul.mubr.f32.gmra.mrb[0].mxu0 %v609
        %v836 = vpop.f32.mrb[0].mxu0
        %v837 = vadd.f32 0.0, %v836
        %v838 = vpop.f32.mrb[0].mxu0
        %v839 = vadd.f32 0.0, %v838
        %840 = vmatprep.mubr.f32.mxu0 0.0
        %841 = vmatmul.mubr.f32.gmra.mrb[0].mxu0 %v612
        %v842 = vpop.f32.mrb[0].mxu0
        %v843 = vadd.f32 0.0, %v842
        %v844 = vpop.f32.mrb[0].mxu0
        %v845 = vadd.f32 0.0, %v844
        %846 = vmatprep.mubr.f32.mxu0 0.0
        %847 = vmatmul.mubr.f32.gmra.mrb[0].mxu0 %v615
        %v848 = vpop.f32.mrb[0].mxu0
        %v849 = vadd.f32 0.0, %v848
        %v850 = vpop.f32.mrb[0].mxu0
        %v851 = vadd.f32 0.0, %v850
        %852 = vmatprep.mubr.f32.mxu0 0.0
        %853 = vmatmul.mubr.f32.gmra.mrb[0].mxu0 %v618
        %v854 = vpop.f32.mrb[0].mxu0
        %v855 = vadd.f32 0.0, %v854
        %v856 = vpop.f32.mrb[0].mxu0
        %v857 = vadd.f32 0.0, %v856
        %858 = vmatprep.mubr.f32.mxu0 0.0
        %859 = vmatmul.mubr.f32.gmra.mrb[0].mxu0 %v621
        %v860 = vpop.f32.mrb[0].mxu0
        %v861 = vadd.f32 0.0, %v860
        %v862 = vpop.f32.mrb[0].mxu0
        %v863 = vadd.f32 0.0, %v862
        %864 = vmatprep.mubr.f32.mxu0 0.0
        %865 = vmatmul.mubr.f32.gmra.mrb[0].mxu0 %v624
        %v866 = vpop.f32.mrb[0].mxu0
        %v867 = vadd.f32 0.0, %v866
        %v868 = vpop.f32.mrb[0].mxu0
        %v869 = vadd.f32 0.0, %v868
        %870 = vmatprep.mubr.f32.mxu0 0.0
        %871 = vmatmul.mubr.f32.gmra.mrb[0].mxu0 %v627
        %v872 = vpop.f32.mrb[0].mxu0
        %v873 = vadd.f32 0.0, %v872
        %v874 = vpop.f32.mrb[0].mxu0
        %v875 = vadd.f32 0.0, %v874
        %876 = vmatprep.mubr.f32.mxu0 0.0
        %877 = vmatmul.mubr.f32.gmra.mrb[0].mxu0 %v630
        %v878 = vpop.f32.mrb[0].mxu0
        %v879 = vadd.f32 0.0, %v878
        %v880 = vpop.f32.mrb[0].mxu0
        %v881 = vadd.f32 0.0, %v880
        %882 = vmatprep.mubr.f32.mxu0 0.0
        %883 = vmatmul.mubr.f32.gmra.mrb[0].mxu0 %v633
        %v884 = vpop.f32.mrb[0].mxu0
        %v885 = vadd.f32 0.0, %v884
        %v886 = vpop.f32.mrb[0].mxu0
        %v887 = vadd.f32 0.0, %v886
        %888 = vmatprep.mubr.f32.mxu0 0.0
        %889 = vmatmul.mubr.f32.gmra.mrb[0].mxu0 %v636
        %v890 = vpop.f32.mrb[0].mxu0
        %v891 = vadd.f32 0.0, %v890
        %v892 = vpop.f32.mrb[0].mxu0
        %v893 = vadd.f32 0.0, %v892
        %894 = vdwg.mxu0
        %v895 = vadd.f32 %v413, %v705
        %v896 = vadd.f32 %v414, %v707
        %v897 = vadd.f32 %v415, %v711
        %v898 = vadd.f32 %v416, %v713
        %v899 = vadd.f32 %v417, %v717
        %v900 = vadd.f32 %v418, %v719
        %v901 = vadd.f32 %v419, %v723
        %v902 = vadd.f32 %v420, %v725
        %v903 = vadd.f32 %v421, %v729
        %v904 = vadd.f32 %v422, %v731
        %v905 = vadd.f32 %v423, %v735
        %v906 = vadd.f32 %v424, %v737
        %v907 = vadd.f32 %v425, %v741
        %v908 = vadd.f32 %v426, %v743
        %v909 = vadd.f32 %v427, %v747
        %v910 = vadd.f32 %v428, %v749
        %v911 = vadd.f32 %v429, %v753
        %v912 = vadd.f32 %v430, %v755
        %v913 = vadd.f32 %v431, %v759
        %v914 = vadd.f32 %v432, %v761
        %v915 = vadd.f32 %v433, %v765
        %v916 = vadd.f32 %v434, %v767
        %v917 = vadd.f32 %v435, %v771
        %v918 = vadd.f32 %v436, %v773
        %v919 = vadd.f32 %v437, %v777
        %v920 = vadd.f32 %v438, %v779
        %v921 = vadd.f32 %v439, %v783
        %v922 = vadd.f32 %v440, %v785
        %v923 = vadd.f32 %v441, %v789
        %v924 = vadd.f32 %v442, %v791
        %v925 = vadd.f32 %v443, %v795
        %v926 = vadd.f32 %v444, %v797
        %v927 = vadd.f32 %v445, %v801
        %v928 = vadd.f32 %v446, %v803
        %v929 = vadd.f32 %v447, %v807
        %v930 = vadd.f32 %v448, %v809
        %v931 = vadd.f32 %v449, %v813
        %v932 = vadd.f32 %v450, %v815
        %v933 = vadd.f32 %v451, %v819
        %v934 = vadd.f32 %v452, %v821
        %v935 = vadd.f32 %v453, %v825
        %v936 = vadd.f32 %v454, %v827
        %v937 = vadd.f32 %v455, %v831
        %v938 = vadd.f32 %v456, %v833
        %v939 = vadd.f32 %v457, %v837
        %v940 = vadd.f32 %v458, %v839
        %v941 = vadd.f32 %v459, %v843
        %v942 = vadd.f32 %v460, %v845
        %v943 = vadd.f32 %v461, %v849
        %v944 = vadd.f32 %v462, %v851
        %v945 = vadd.f32 %v463, %v855
        %v946 = vadd.f32 %v464, %v857
        %v947 = vadd.f32 %v465, %v861
        %v948 = vadd.f32 %v466, %v863
        %v949 = vadd.f32 %v467, %v867
        %v950 = vadd.f32 %v468, %v869
        %v951 = vadd.f32 %v469, %v873
        %v952 = vadd.f32 %v470, %v875
        %v953 = vadd.f32 %v471, %v879
        %v954 = vadd.f32 %v472, %v881
        %v955 = vadd.f32 %v473, %v885
        %v956 = vadd.f32 %v474, %v887
        %v957 = vadd.f32 %v475, %v891
        %v958 = vadd.f32 %v476, %v893
        %959 = vst [vmem:[%s216] sm:$0xff] %v895
        %960 = vst [vmem:[%s216 + $0x8] sm:$0xff] %v896
        %961 = vst [vmem:[%s216 + $0x10] sm:$0xff] %v897
        %962 = vst [vmem:[%s216 + $0x18] sm:$0xff] %v898
        %963 = vst [vmem:[%s216 + $0x20] sm:$0xff] %v899
        %964 = vst [vmem:[%s216 + $0x28] sm:$0xff] %v900
        %965 = vst [vmem:[%s216 + $0x30] sm:$0xff] %v901
        %966 = vst [vmem:[%s216 + $0x38] sm:$0xff] %v902
        %967 = vst [vmem:[%s216 + $0x40] sm:$0xff] %v903
        %968 = vst [vmem:[%s216 + $0x48] sm:$0xff] %v904
        %969 = vst [vmem:[%s216 + $0x50] sm:$0xff] %v905
        %970 = vst [vmem:[%s216 + $0x58] sm:$0xff] %v906
        %971 = vst [vmem:[%s216 + $0x60] sm:$0xff] %v907
        %972 = vst [vmem:[%s216 + $0x68] sm:$0xff] %v908
        %973 = vst [vmem:[%s216 + $0x70] sm:$0xff] %v909
        %974 = vst [vmem:[%s216 + $0x78] sm:$0xff] %v910
        %975 = vst [vmem:[%s216 + $0x80] sm:$0xff] %v911
        %976 = vst [vmem:[%s216 + $0x88] sm:$0xff] %v912
        %977 = vst [vmem:[%s216 + $0x90] sm:$0xff] %v913
        %978 = vst [vmem:[%s216 + $0x98] sm:$0xff] %v914
        %979 = vst [vmem:[%s216 + $0xa0] sm:$0xff] %v915
        %980 = vst [vmem:[%s216 + $0xa8] sm:$0xff] %v916
        %981 = vst [vmem:[%s216 + $0xb0] sm:$0xff] %v917
        %982 = vst [vmem:[%s216 + $0xb8] sm:$0xff] %v918
        %983 = vst [vmem:[%s216 + $0xc0] sm:$0xff] %v919
        %984 = vst [vmem:[%s216 + $0xc8] sm:$0xff] %v920
        %985 = vst [vmem:[%s216 + $0xd0] sm:$0xff] %v921
        %986 = vst [vmem:[%s216 + $0xd8] sm:$0xff] %v922
        %987 = vst [vmem:[%s216 + $0xe0] sm:$0xff] %v923
        %988 = vst [vmem:[%s216 + $0xe8] sm:$0xff] %v924
        %989 = vst [vmem:[%s216 + $0xf0] sm:$0xff] %v925
        %990 = vst [vmem:[%s216 + $0xf8] sm:$0xff] %v926
        %991 = vst [vmem:[%s216 + $0x100] sm:$0xff] %v927
        %992 = vst [vmem:[%s216 + $0x108] sm:$0xff] %v928
        %993 = vst [vmem:[%s216 + $0x110] sm:$0xff] %v929
        %994 = vst [vmem:[%s216 + $0x118] sm:$0xff] %v930
        %995 = vst [vmem:[%s216 + $0x120] sm:$0xff] %v931
        %996 = vst [vmem:[%s216 + $0x128] sm:$0xff] %v932
        %997 = vst [vmem:[%s216 + $0x130] sm:$0xff] %v933
        %998 = vst [vmem:[%s216 + $0x138] sm:$0xff] %v934
        %999 = vst [vmem:[%s216 + $0x140] sm:$0xff] %v935
        %1000 = vst [vmem:[%s216 + $0x148] sm:$0xff] %v936
        %1001 = vst [vmem:[%s216 + $0x150] sm:$0xff] %v937
        %1002 = vst [vmem:[%s216 + $0x158] sm:$0xff] %v938
        %1003 = vst [vmem:[%s216 + $0x160] sm:$0xff] %v939
        %1004 = vst [vmem:[%s216 + $0x168] sm:$0xff] %v940
        %1005 = vst [vmem:[%s216 + $0x170] sm:$0xff] %v941
        %1006 = vst [vmem:[%s216 + $0x178] sm:$0xff] %v942
        %1007 = vst [vmem:[%s216 + $0x180] sm:$0xff] %v943
        %1008 = vst [vmem:[%s216 + $0x188] sm:$0xff] %v944
        %1009 = vst [vmem:[%s216 + $0x190] sm:$0xff] %v945
        %1010 = vst [vmem:[%s216 + $0x198] sm:$0xff] %v946
        %1011 = vst [vmem:[%s216 + $0x1a0] sm:$0xff] %v947
        %1012 = vst [vmem:[%s216 + $0x1a8] sm:$0xff] %v948
        %1013 = vst [vmem:[%s216 + $0x1b0] sm:$0xff] %v949
        %1014 = vst [vmem:[%s216 + $0x1b8] sm:$0xff] %v950
        %1015 = vst [vmem:[%s216 + $0x1c0] sm:$0xff] %v951
        %1016 = vst [vmem:[%s216 + $0x1c8] sm:$0xff] %v952
        %1017 = vst [vmem:[%s216 + $0x1d0] sm:$0xff] %v953
        %1018 = vst [vmem:[%s216 + $0x1d8] sm:$0xff] %v954
        %1019 = vst [vmem:[%s216 + $0x1e0] sm:$0xff] %v955
        %1020 = vst [vmem:[%s216 + $0x1e8] sm:$0xff] %v956
        %1021 = vst [vmem:[%s216 + $0x1f0] sm:$0xff] %v957
        %1022 = vst [vmem:[%s216 + $0x1f8] sm:$0xff] %v958
        %s1023 = sand.u32 %s72, 1
        %s1024 = scalar_lea.sflag [#allocation4], %s1023
        %s1025 = sand.u32 %s72, 1
        %s1026 = smul.addr %s1025, 2
        %s1027 = scalar_lea.vmem [#allocation5], %s1026
        %s1028 = sand.u32 %s98, 1
        %s1029 = scalar_lea.sflag [#allocation7], %s1028
        %s1030 = sand.u32 %s98, 1
        %s1031 = smul.addr %s1030, 512
        %s1032 = scalar_lea.vmem [#allocation6], %s1031
        %p1033 = scmp.lt.s32.totalorder %s28, 1
        %s1034 = scalar_select %p1033, %s28, 1
        %s1035 = scalar_lea.vmem %s3, %s1034
        // Predicated region
        $region33: #{tpu_custom_call.1} parent=23 // pred_check
          %p1036 = pneg %p82
        $region34: #{tpu_custom_call.1} parent=23 // pred_check_branch
          %1038 = sbr.rel (%p1036) target = $region36
        $region35: #{tpu_custom_call.1} parent=23 // pred_region
          %s1040 = ssub.s32 32, 32
          %1041 = vsyncadd %s1024, %s1040
          %s1042 = smul.addr %s28, 2
          %s1043 = smul.addr %s1042, 16
          %s1044 = scalar_lea.hbm %s1, %s1043
          %s1046 = sshll.u32 %s1027, 4
          %s1047 = int_to_ptr.vmem [resolvable:$true] %s1046
          %1049 = dma.vmem_to_hbm [thread:$0]  %s1047, 32, %s1044, %s1024
        $region36: #{tpu_custom_call.1} parent=23 // pred_fallthru
          _
        // Predicated region
        $region37: #{tpu_custom_call.1} parent=23 // pred_check
          %p1050 = pneg %p108
        $region38: #{tpu_custom_call.1} parent=23 // pred_check_branch
          %1052 = sbr.rel (%p1050) target = $region40
        $region39: #{tpu_custom_call.1} parent=23 // pred_region
          %s1054 = ssub.s32 8192, 8192
          %1055 = vsyncadd %s1029, %s1054
          %s1056 = smul.addr %s28, 64
          %s1057 = smul.addr %s1056, 128
          %s1058 = scalar_lea.hbm %s2, %s1057
          %s1059 = sshll.u32 %s1032, 4
          %s1060 = int_to_ptr.vmem [resolvable:$true] %s1059
          %1065 = dma.vmem_to_hbm [thread:$0]  %s1060, 8192, %s1058, %s1029, 256, 256, 16
        $region40: #{tpu_custom_call.1} parent=23 // pred_fallthru
          _
        // Predicated region
        $region41: #{tpu_custom_call.1} parent=23 // pred_check
          %p1066 = pneg %p134
        $region42: #{tpu_custom_call.1} parent=23 // pred_check_branch
          %1068 = sbr.rel (%p1066) target = $region44
        $region43: #{tpu_custom_call.1} parent=23 // pred_region
          _
        $region44: #{tpu_custom_call.1} parent=23 // pred_fallthru
          _
      $region24: #{tpu_custom_call.1} parent=5 // pred_fallthru
        _
      %p1069 = scmp.le.s32.totalorder 2, %s19
      // Predicated region
      $region45: #{tpu_custom_call.1} parent=5 // pred_check
        %p1070 = pneg %p1069
      $region46: #{tpu_custom_call.1} parent=5 // pred_check_branch
        %1072 = sbr.rel (%p1070) target = $region48
      $region47: #{tpu_custom_call.1} parent=5 // pred_region
        %s1073 = ssub.s32 %s19, 2
        // Predicated region
        $region49: #{tpu_custom_call.1} parent=47 // pred_check
          %p1074 = pneg %p88
        $region50: #{tpu_custom_call.1} parent=47 // pred_check_branch
          %1076 = sbr.rel (%p1074) target = $region52
        $region51: #{tpu_custom_call.1} parent=47 // pred_region
          %s1077 = sand.u32 %s73, 1
          %s1078 = scalar_lea.sflag [#allocation4], %s1077
          %s1079 = sand.u32 %s73, 1
          %s1080 = smul.addr %s1079, 2
          %s1081 = scalar_lea.vmem [#allocation5], %s1080
          %1082 = dma.done %s1078, 32
        $region52: #{tpu_custom_call.1} parent=47 // pred_fallthru
          _
        // Predicated region
        $region53: #{tpu_custom_call.1} parent=47 // pred_check
          %p1083 = pneg %p114
        $region54: #{tpu_custom_call.1} parent=47 // pred_check_branch
          %1085 = sbr.rel (%p1083) target = $region56
        $region55: #{tpu_custom_call.1} parent=47 // pred_region
          %s1086 = sand.u32 %s99, 1
          %s1087 = scalar_lea.sflag [#allocation7], %s1086
          %s1088 = sand.u32 %s99, 1
          %s1089 = smul.addr %s1088, 512
          %s1090 = scalar_lea.vmem [#allocation6], %s1089
          %1091 = dma.done %s1087, 8192
        $region56: #{tpu_custom_call.1} parent=47 // pred_fallthru
          _
        // Predicated region
        $region57: #{tpu_custom_call.1} parent=47 // pred_check
          %p1092 = pneg %p140
        $region58: #{tpu_custom_call.1} parent=47 // pred_check_branch
          %1094 = sbr.rel (%p1092) target = $region60
        $region59: #{tpu_custom_call.1} parent=47 // pred_region
          %p1095 = scmp.lt.s32.totalorder %s30, 1
          %s1096 = scalar_select %p1095, %s30, 1
          %s1097 = scalar_lea.vmem %s3, %s1096
        $region60: #{tpu_custom_call.1} parent=47 // pred_fallthru
          _
      $region48: #{tpu_custom_call.1} parent=5 // pred_fallthru
        _
    $region6: #{tpu_custom_call.1} parent=1 // loop_footer
      %s23 = sadd.s32 1, %s19
    $region7: #{tpu_custom_call.1} parent=1 // loop_footer_branch
      %18 = sbr.rel target = $region3
    $region8: #{tpu_custom_call.1} parent=1 // loop_exit
      _
    %1098 = vsyncpa [#allocation3], 1
    %s1099 = scalar_lea.sflag [#allocation3], 1
    %1100 = vsyncpa %s1099, 1
    %1101 = vsyncpa [#allocation4], 1
    %s1102 = scalar_lea.sflag [#allocation4], 1
    %1103 = vsyncpa %s1102, 1
    %1104 = vsyncpa [#allocation7], 1
    %s1105 = scalar_lea.sflag [#allocation7], 1
    %1106 = vsyncpa %s1105, 1

</llo_original>
